<compile_context>
chip_gen: v5e
topology: v5e:2x2
jax: 0.10.0
libtpu: 0.0.40
codegen_flags: <defaults>
</compile_context>

<pallas_src>
import functools

import jax
import jax.numpy as jnp
from jax.experimental import pallas as pl
from jax.experimental.pallas import tpu as pltpu


def _round_up(a, m):
    return ((a + m - 1) // m) * m


def temporal_block_kernel(x_ref, w1d_ref, b1d_ref, w2_ref, b2_ref, o_ref,
                          xb_ref, h1b_ref, *, K, dilation, pad, halo, tile_l,
                          nb, cout, carry):
    """One (batch-block, L-tile) grid step.

    x_ref   : (Nb, Cin, tile_l)           bf16  current time tile (NCL layout)
    w1d_ref : (2*Cout, K*Cin_p)           f32   conv1 taps  +  fused 1x1 downsample rows
    b1d_ref : (2*Cout, 1)                 f32   [b1 ; bd]
    w2_ref  : (Cout, K*Cout_p)            f32   conv2 taps
    b2_ref  : (Cout, 1)                   f32
    o_ref   : (Nb, Cout, tile_l)          f32/out_dtype
    xb_ref  : (Nb, Cin_p,  halo+tile_l)   f32   scratch: causal halo + current x tile
    h1b_ref : (Nb, Cout_p, halo+tile_l)   f32   scratch: causal halo + conv1 activation

    The L-tile axis is "arbitrary" (sequential) so the halo carried in scratch
    is valid; the batch-block axis is "parallel" (each core owns its own
    scratch instance, and each core's first tile re-zeroes the halo).
    """
    i = pl.program_id(1)  # position along the sequential L-tile axis

    @pl.when(i == 0)
    def _init():
        # Zero the halo region AND the sublane-padding rows so the extra zero
        # contraction rows feed genuine zeros (never uninitialized VMEM) into
        # the matmuls, and the causal padding at t<0 is correct.
        xb_ref[...] = jnp.zeros_like(xb_ref)
        h1b_ref[...] = jnp.zeros_like(h1b_ref)

    w1d = w1d_ref[...]          # (2*Cout, K*Cin_p)
    b1d = b1d_ref[...]          # (2*Cout, 1)
    w2 = w2_ref[...]            # (Cout,  K*Cout_p)
    b2 = b2_ref[...]            # (Cout, 1)

    cin = x_ref.shape[1]
    base = halo - pad           # lane offset of the first (j=0) dilated tap

    for b in range(nb):         # static unroll over the batch sub-block
        x_tile = x_ref[b].astype(jnp.float32)                # (Cin, tile_l)
        xb_ref[b, :cin, halo:] = x_tile                       # lane-aligned store

        # ---- conv1 + fused 1x1 downsample: ONE MXU matmul on stacked taps ----
        taps1 = jnp.concatenate(
            [xb_ref[b, :, base + j * dilation: base + j * dilation + tile_l]
             for j in range(K)], axis=0)                      # (K*Cin_p, tile_l)
        acc = jnp.dot(w1d, taps1, preferred_element_type=jnp.float32) + b1d
        h1 = jnp.maximum(acc[:cout], 0.0)                     # chomp analytic; dropout == id
        res = acc[cout:]                                      # downsample branch (+ bd)

        h1b_ref[b, :cout, halo:] = h1                         # aligned (Cout_p multiple of 8)

        # ---- conv2: same single-matmul trick on the conv1 activation ----
        taps2 = jnp.concatenate(
            [h1b_ref[b, :, base + j * dilation: base + j * dilation + tile_l]
             for j in range(K)], axis=0)                      # (K*Cout_p, tile_l)
        out2 = jnp.maximum(
            jnp.dot(w2, taps2, preferred_element_type=jnp.float32) + b2, 0.0)

        # ---- final ReLU(branch + residual), lane-dense store ----
        o_ref[b] = jnp.maximum(out2 + res, 0.0).astype(o_ref.dtype)

        if carry and pad > 0:
            # Carry the last `pad` time steps into the halo slot for the next
            # L-tile.  Alias-safe because tile_l >= pad (asserted in wrapper).
            xb_ref[b, :, halo - pad:halo] = (
                xb_ref[b, :, halo + tile_l - pad:halo + tile_l])
            h1b_ref[b, :, halo - pad:halo] = (
                h1b_ref[b, :, halo + tile_l - pad:halo + tile_l])


def temporal_block(x_ncl, w1, b1, w2, b2, wd, bd, *, kernel_size, stride,
                   dilation, padding, tile_l_target=2048, max_nb=8,
                   out_dtype=jnp.float32):
    """x_ncl: (N, Cin, L) float32 in PyTorch NCL layout.  Returns (N, Cout, L)."""
    assert stride == 1, "TCN TemporalBlock uses stride=1"
    assert padding == dilation * (kernel_size - 1), \
        "residual add requires padding == dilation*(kernel_size-1)"
    N, Cin, L = x_ncl.shape
    Cout, _, K = w1.shape
    assert K == kernel_size
    assert w2.shape == (Cout, Cout, K) and wd.shape == (Cout, Cin)

    f32 = jnp.float32
    Cin_p = _round_up(Cin, 8)          # sublane-pad channels (f32 packing unit)
    Cout_p = _round_up(Cout, 8)

    # ---- tiling: 128-aligned L tiles (big), Nb batch elements per step ----
    tile_l = _round_up(min(tile_l_target, _round_up(L, 128)), 128)
    L_pad = _round_up(L, tile_l)
    num_tiles = L_pad // tile_l
    assert tile_l >= padding, "halo carry requires tile_l >= padding"

    Nb = max(1, min(N, max_nb))
    N_pad = _round_up(N, Nb)
    n_blocks = N_pad // Nb

    halo = _round_up(padding, 128) if padding > 0 else 0   # lane-aligned halo slab

    # bf16 input in HBM (half traffic); zero-pad batch and length (causal conv:
    # trailing zeros only affect discarded output columns).
    x = jnp.pad(x_ncl, ((0, N_pad - N), (0, 0), (0, L_pad - L))).astype(jnp.bfloat16)

    # ---- fused conv1 + 1x1-downsample weight: (2*Cout, K*Cin_p) ----
    # rows [0:Cout)        : conv1, col [j*Cin_p + ci] = w1[co, ci, j]
    # rows [Cout:2*Cout)   : downsample, in the j=K-1 tap columns (== x tile)
    w1_rows = jnp.pad(jnp.transpose(w1, (0, 2, 1)),
                      ((0, 0), (0, 0), (0, Cin_p - Cin))).reshape(Cout, K * Cin_p)
    wd_rows = jnp.zeros((Cout, K, Cin_p), f32).at[:, K - 1, :Cin].set(wd)
    wd_rows = wd_rows.reshape(Cout, K * Cin_p)
    w1d = jnp.concatenate([w1_rows, wd_rows], axis=0).astype(f32)
    b1d = jnp.concatenate([b1, bd]).reshape(2 * Cout, 1).astype(f32)

    w2_f = jnp.pad(jnp.transpose(w2, (0, 2, 1)),
                   ((0, 0), (0, 0), (0, Cout_p - Cout))).reshape(Cout, K * Cout_p)
    w2_f = w2_f.astype(f32)
    b2_r = b2.reshape(Cout, 1).astype(f32)

    kern = functools.partial(temporal_block_kernel, K=K, dilation=dilation,
                             pad=padding, halo=halo, tile_l=tile_l, nb=Nb,
                             cout=Cout, carry=(num_tiles > 1))

    flops = 2 * N * L * (K * Cin * Cout + K * Cout * Cout + Cin * Cout)
    bytes_accessed = int(N_pad * Cin * L_pad * 2            # x (bf16)
                         + N_pad * Cout * L_pad * jnp.dtype(out_dtype).itemsize
                         + (w1d.size + b1d.size + w2_f.size + b2_r.size) * 4)

    # VMEM budget derived from the chosen tile (double-buffered blocks + halo
    # scratch).  Capped at 64 MiB so it is valid on every generation (v7x has
    # 64 MiB physical per TC).
    block_bytes = 2 * (Nb * Cin * tile_l * 2) + 2 * (Nb * Cout * tile_l * 4)
    scratch_bytes = Nb * (Cin_p + Cout_p) * (halo + tile_l) * 4
    vmem_limit = int(min(64 * 2**20,
                         max(32 * 2**20, block_bytes + scratch_bytes + (8 << 20))))

    # TODO(synk): on v7x with N < 2 batch blocks, add an L-split core-parallel
    # grid axis (halo reloaded from HBM at segment starts) so both TensorCores
    # are used; with only the batch axis "parallel" one core idles when N is 1.
    out = pl.pallas_call(
        kern,
        out_shape=jax.ShapeDtypeStruct((N_pad, Cout, L_pad), out_dtype),
        grid_spec=pltpu.PrefetchScalarGridSpec(
            num_scalar_prefetch=0,
            grid=(n_blocks, num_tiles),
            in_specs=[
                pl.BlockSpec((Nb, Cin, tile_l), lambda n, i: (n, 0, i)),
                pl.BlockSpec((2 * Cout, K * Cin_p), lambda n, i: (0, 0)),
                pl.BlockSpec((2 * Cout, 1), lambda n, i: (0, 0)),
                pl.BlockSpec((Cout, K * Cout_p), lambda n, i: (0, 0)),
                pl.BlockSpec((Cout, 1), lambda n, i: (0, 0)),
            ],
            out_specs=pl.BlockSpec((Nb, Cout, tile_l), lambda n, i: (n, 0, i)),
            scratch_shapes=[
                pltpu.VMEM((Nb, Cin_p, halo + tile_l), jnp.float32),   # x halo buf
                pltpu.VMEM((Nb, Cout_p, halo + tile_l), jnp.float32),  # h1 halo buf
            ],
        ),
        compiler_params=pltpu.CompilerParams(
            dimension_semantics=("parallel", "arbitrary"),
            vmem_limit_bytes=vmem_limit,
        ),
        cost_estimate=pl.CostEstimate(flops=flops, transcendentals=0,
                                      bytes_accessed=bytes_accessed),
    )(x, w1d, b1d, w2_f, b2_r)

    return out[:N, :, :L]   # strip batch/length padding; NCL layout, no transpose


def weight_norm_effective(v, g):
    """PyTorch weight_norm (dim=0): w = g * v / ||v||, norm over all dims but 0."""
    norm = jnp.sqrt(jnp.sum(v * v, axis=tuple(range(1, v.ndim)), keepdims=True))
    return g.reshape((-1,) + (1,) * (v.ndim - 1)) * v / norm


def ref_forward(x, w1, b1, w2, b2, wd, bd, *, padding, dilation):
    """Independent pure-JAX f32 reference using lax.conv_general_dilated."""
    def conv(inp, w, b, pad, dil):
        y = jax.lax.conv_general_dilated(
            inp, w, window_strides=(1,), padding=[(pad, pad)],
            rhs_dilation=(dil,), dimension_numbers=('NCH', 'OIH', 'NCH'))
        y = y[:, :, :-pad]                      # Chomp1d
        return y + b.reshape(1, -1, 1)

    h = jnp.maximum(conv(x, w1, b1, padding, dilation), 0.0)   # dropout = id (eval)
    h = jnp.maximum(conv(h, w2, b2, padding, dilation), 0.0)
    res = jax.lax.conv_general_dilated(
        x, wd[:, :, None], window_strides=(1,), padding=[(0, 0)],
        dimension_numbers=('NCH', 'OIH', 'NCH')) + bd.reshape(1, -1, 1)
    return jnp.maximum(h + res, 0.0)


if __name__ == "__main__":
    # TemporalBlock(n_inputs=4, n_outputs=8, kernel_size=3, stride=1,
    #               dilation=2, padding=(3-1)*2=4, dropout=0.2)
    N, Cin, Cout, L = 2, 4, 8, 16
    K, stride, dilation = 3, 1, 2
    padding = (K - 1) * dilation

    key = jax.random.PRNGKey(0)
    ks = jax.random.split(key, 9)

    x = jax.random.normal(ks[0], (N, Cin, L), jnp.float32)

    # weight_norm parameters (v, g) + biases, deterministic synthetic init.
    v1 = 0.01 * jax.random.normal(ks[1], (Cout, Cin, K), jnp.float32)
    g1 = 1.0 + 0.1 * jax.random.normal(ks[2], (Cout,), jnp.float32)
    b1 = 0.1 * jax.random.normal(ks[3], (Cout,), jnp.float32)
    v2 = 0.01 * jax.random.normal(ks[4], (Cout, Cout, K), jnp.float32)
    g2 = 1.0 + 0.1 * jax.random.normal(ks[5], (Cout,), jnp.float32)
    b2 = 0.1 * jax.random.normal(ks[6], (Cout,), jnp.float32)
    wd = 0.01 * jax.random.normal(ks[7], (Cout, Cin), jnp.float32)   # 1x1 conv
    bd = 0.1 * jax.random.normal(ks[8], (Cout,), jnp.float32)

    w1 = weight_norm_effective(v1, g1)
    w2 = weight_norm_effective(v2, g2)
    # TODO(synk): nn.Dropout in training mode (stochastic masking) is not
    # reproduced; this forward corresponds to eval()/inference.

    out = temporal_block(x, w1, b1, w2, b2, wd, bd,
                         kernel_size=K, stride=stride,
                         dilation=dilation, padding=padding)
    out = jax.block_until_ready(out)

    ref = ref_forward(x, w1, b1, w2, b2, wd, bd,
                      padding=padding, dilation=dilation)
    assert out.shape == (N, Cout, L)
    # Contract: x travels as bf16 (HBM traffic); weights / intermediates / output
    # are f32, so the only error source is the bf16 rounding of the input.
    assert jnp.allclose(out, ref, atol=2e-2, rtol=2e-2), \
        f"max abs err {jnp.max(jnp.abs(out - ref))}"

    print("KERNEL_OK")
</pallas_src>

<mosaic_0001>
module attributes {stable_mosaic.version = 11 : i64} {
  func.func @temporal_block_kernel(%arg0: i32, %arg1: i32, %arg2: memref<2x4x128xbf16, #tpu.memory_space<vmem>>, %arg3: memref<16x24xf32, #tpu.memory_space<vmem>>, %arg4: memref<16x1xf32, #tpu.memory_space<vmem>>, %arg5: memref<8x24xf32, #tpu.memory_space<vmem>>, %arg6: memref<8x1xf32, #tpu.memory_space<vmem>>, %arg7: memref<2x8x128xf32, #tpu.memory_space<vmem>>, %arg8: memref<2x8x256xf32, #tpu.memory_space<vmem>>, %arg9: memref<2x8x256xf32, #tpu.memory_space<vmem>>) attributes {dimension_semantics = [#tpu.dimension_semantics<parallel>, #tpu.dimension_semantics<arbitrary>], iteration_bounds = array<i64: 1, 1>, scalar_prefetch = 0 : i64, scratch_operands = 2 : i64, tpu.core_type = #tpu.core_type<tc>, window_params = [{transform_indices = @transform_0, window_bounds = array<i64: 2, 4, 128>}, {pipeline_mode = #tpu.pipeline_mode<synchronous>, transform_indices = @transform_1, window_bounds = array<i64: 16, 24>}, {pipeline_mode = #tpu.pipeline_mode<synchronous>, transform_indices = @transform_2, window_bounds = array<i64: 16, 1>}, {pipeline_mode = #tpu.pipeline_mode<synchronous>, transform_indices = @transform_3, window_bounds = array<i64: 8, 24>}, {pipeline_mode = #tpu.pipeline_mode<synchronous>, transform_indices = @transform_4, window_bounds = array<i64: 8, 1>}, {transform_indices = @transform_5, window_bounds = array<i64: 2, 8, 128>}]} {
    %c0_i32 = arith.constant 0 : i32
    %0 = arith.cmpi eq, %arg1, %c0_i32 : i32
    %1 = arith.extui %0 : i1 to i32
    %c0_i32_0 = arith.constant 0 : i32
    %2 = arith.cmpi ne, %1, %c0_i32_0 : i32
    scf.if %2 {
      %cst_73 = arith.constant 0.000000e+00 : f32
      %89 = vector.broadcast %cst_73 : f32 to vector<2x8x256xf32>
      %c0_74 = arith.constant 0 : index
      %c0_75 = arith.constant 0 : index
      %c0_76 = arith.constant 0 : index
      %90 = vector.load %arg8[%c0_74, %c0_75, %c0_76] : memref<2x8x256xf32, #tpu.memory_space<vmem>>, vector<2x8x256xf32>
      tpu.vector_store %arg8[%c0_74, %c0_75, %c0_76], %89 {strides = array<i32>} : memref<2x8x256xf32, #tpu.memory_space<vmem>>, vector<2x8x256xf32>,
      %cst_77 = arith.constant 0.000000e+00 : f32
      %91 = vector.broadcast %cst_77 : f32 to vector<2x8x256xf32>
      %c0_78 = arith.constant 0 : index
      %c0_79 = arith.constant 0 : index
      %c0_80 = arith.constant 0 : index
      %92 = vector.load %arg9[%c0_78, %c0_79, %c0_80] : memref<2x8x256xf32, #tpu.memory_space<vmem>>, vector<2x8x256xf32>
      tpu.vector_store %arg9[%c0_78, %c0_79, %c0_80], %91 {strides = array<i32>} : memref<2x8x256xf32, #tpu.memory_space<vmem>>, vector<2x8x256xf32>,
    } else {
    }
    %c0 = arith.constant 0 : index
    %c0_1 = arith.constant 0 : index
    %3 = vector.load %arg3[%c0, %c0_1] : memref<16x24xf32, #tpu.memory_space<vmem>>, vector<16x24xf32>
    %c0_2 = arith.constant 0 : index
    %c0_3 = arith.constant 0 : index
    %4 = vector.load %arg4[%c0_2, %c0_3] : memref<16x1xf32, #tpu.memory_space<vmem>>, vector<16x1xf32>
    %c0_4 = arith.constant 0 : index
    %c0_5 = arith.constant 0 : index
    %5 = vector.load %arg5[%c0_4, %c0_5] : memref<8x24xf32, #tpu.memory_space<vmem>>, vector<8x24xf32>
    %c0_6 = arith.constant 0 : index
    %c0_7 = arith.constant 0 : index
    %6 = vector.load %arg6[%c0_6, %c0_7] : memref<8x1xf32, #tpu.memory_space<vmem>>, vector<8x1xf32>
    %c0_8 = arith.constant 0 : index
    %c0_9 = arith.constant 0 : index
    %c0_10 = arith.constant 0 : index
    %7 = vector.load %arg2[%c0_8, %c0_9, %c0_10] : memref<2x4x128xbf16, #tpu.memory_space<vmem>>, vector<1x4x128xbf16>
    %8 = vector.shape_cast %7 : vector<1x4x128xbf16> to vector<4x128xbf16>
    %9 = arith.extf %8 : vector<4x128xbf16> to vector<4x128xf32>
    %c0_11 = arith.constant 0 : index
    %c0_12 = arith.constant 0 : index
    %c128 = arith.constant 128 : index
    %10 = vector.load %arg8[%c0_11, %c0_12, %c128] : memref<2x8x256xf32, #tpu.memory_space<vmem>>, vector<1x4x128xf32>
    %11 = vector.shape_cast %10 : vector<1x4x128xf32> to vector<4x128xf32>
    %12 = vector.shape_cast %9 : vector<4x128xf32> to vector<1x4x128xf32>
    tpu.vector_store %arg8[%c0_11, %c0_12, %c128], %12 {strides = array<i32>} : memref<2x8x256xf32, #tpu.memory_space<vmem>>, vector<1x4x128xf32>,
    %c0_13 = arith.constant 0 : index
    %c0_14 = arith.constant 0 : index
    %c124 = arith.constant 124 : index
    %13 = vector.load %arg8[%c0_13, %c0_14, %c124] : memref<2x8x256xf32, #tpu.memory_space<vmem>>, vector<1x8x128xf32>
    %14 = vector.shape_cast %13 : vector<1x8x128xf32> to vector<8x128xf32>
    %c0_15 = arith.constant 0 : index
    %c0_16 = arith.constant 0 : index
    %c126 = arith.constant 126 : index
    %15 = vector.load %arg8[%c0_15, %c0_16, %c126] : memref<2x8x256xf32, #tpu.memory_space<vmem>>, vector<1x8x128xf32>
    %16 = vector.shape_cast %15 : vector<1x8x128xf32> to vector<8x128xf32>
    %c0_17 = arith.constant 0 : index
    %c0_18 = arith.constant 0 : index
    %c128_19 = arith.constant 128 : index
    %17 = vector.load %arg8[%c0_17, %c0_18, %c128_19] : memref<2x8x256xf32, #tpu.memory_space<vmem>>, vector<1x8x128xf32>
    %18 = vector.shape_cast %17 : vector<1x8x128xf32> to vector<8x128xf32>
    %19 = tpu.concatenate %14, %16, %18 in 0 : vector<8x128xf32>, vector<8x128xf32>, vector<8x128xf32> -> vector<24x128xf32>
    %cst = arith.constant dense<0.000000e+00> : vector<16x128xf32>
    %20 = tpu.matmul %3, %19, %cst {dimension_numbers = #tpu.dot_dimension_numbers<[1], [0], [0], [1], [0, 0, 1, 1], [], []>} : vector<16x24xf32>, vector<24x128xf32>, vector<16x128xf32> -> vector<16x128xf32>
    %21 = vector.broadcast %4 : vector<16x1xf32> to vector<16x128xf32>
    %22 = arith.addf %20, %21 : vector<16x128xf32>
    %23 = vector.extract_strided_slice %22 {offsets = [0, 0], sizes = [8, 128], strides = [1, 1]} : vector<16x128xf32> to vector<8x128xf32>
    %cst_20 = arith.constant 0.000000e+00 : f32
    %24 = vector.broadcast %cst_20 : f32 to vector<8x128xf32>
    %25 = arith.maximumf %23, %24 : vector<8x128xf32>
    %26 = vector.extract_strided_slice %22 {offsets = [8, 0], sizes = [8, 128], strides = [1, 1]} : vector<16x128xf32> to vector<8x128xf32>
    %c0_21 = arith.constant 0 : index
    %c0_22 = arith.constant 0 : index
    %c128_23 = arith.constant 128 : index
    %27 = vector.load %arg9[%c0_21, %c0_22, %c128_23] : memref<2x8x256xf32, #tpu.memory_space<vmem>>, vector<1x8x128xf32>
    %28 = vector.shape_cast %27 : vector<1x8x128xf32> to vector<8x128xf32>
    %29 = vector.shape_cast %25 : vector<8x128xf32> to vector<1x8x128xf32>
    tpu.vector_store %arg9[%c0_21, %c0_22, %c128_23], %29 {strides = array<i32>} : memref<2x8x256xf32, #tpu.memory_space<vmem>>, vector<1x8x128xf32>,
    %c0_24 = arith.constant 0 : index
    %c0_25 = arith.constant 0 : index
    %c124_26 = arith.constant 124 : index
    %30 = vector.load %arg9[%c0_24, %c0_25, %c124_26] : memref<2x8x256xf32, #tpu.memory_space<vmem>>, vector<1x8x128xf32>
    %31 = vector.shape_cast %30 : vector<1x8x128xf32> to vector<8x128xf32>
    %c0_27 = arith.constant 0 : index
    %c0_28 = arith.constant 0 : index
    %c126_29 = arith.constant 126 : index
    %32 = vector.load %arg9[%c0_27, %c0_28, %c126_29] : memref<2x8x256xf32, #tpu.memory_space<vmem>>, vector<1x8x128xf32>
    %33 = vector.shape_cast %32 : vector<1x8x128xf32> to vector<8x128xf32>
    %c0_30 = arith.constant 0 : index
    %c0_31 = arith.constant 0 : index
    %c128_32 = arith.constant 128 : index
    %34 = vector.load %arg9[%c0_30, %c0_31, %c128_32] : memref<2x8x256xf32, #tpu.memory_space<vmem>>, vector<1x8x128xf32>
    %35 = vector.shape_cast %34 : vector<1x8x128xf32> to vector<8x128xf32>
    %36 = tpu.concatenate %31, %33, %35 in 0 : vector<8x128xf32>, vector<8x128xf32>, vector<8x128xf32> -> vector<24x128xf32>
    %cst_33 = arith.constant dense<0.000000e+00> : vector<8x128xf32>
    %37 = tpu.matmul %5, %36, %cst_33 {dimension_numbers = #tpu.dot_dimension_numbers<[1], [0], [0], [1], [0, 0, 1, 1], [], []>} : vector<8x24xf32>, vector<24x128xf32>, vector<8x128xf32> -> vector<8x128xf32>
    %38 = vector.broadcast %6 : vector<8x1xf32> to vector<8x128xf32>
    %39 = arith.addf %37, %38 : vector<8x128xf32>
    %cst_34 = arith.constant 0.000000e+00 : f32
    %40 = vector.broadcast %cst_34 : f32 to vector<8x128xf32>
    %41 = arith.maximumf %39, %40 : vector<8x128xf32>
    %42 = arith.addf %41, %26 : vector<8x128xf32>
    %cst_35 = arith.constant 0.000000e+00 : f32
    %43 = vector.broadcast %cst_35 : f32 to vector<8x128xf32>
    %44 = arith.maximumf %42, %43 : vector<8x128xf32>
    %c0_36 = arith.constant 0 : index
    %c0_37 = arith.constant 0 : index
    %c0_38 = arith.constant 0 : index
    %45 = vector.load %arg7[%c0_36, %c0_37, %c0_38] : memref<2x8x128xf32, #tpu.memory_space<vmem>>, vector<1x8x128xf32>
    %46 = vector.shape_cast %45 : vector<1x8x128xf32> to vector<8x128xf32>
    %47 = vector.shape_cast %44 : vector<8x128xf32> to vector<1x8x128xf32>
    tpu.vector_store %arg7[%c0_36, %c0_37, %c0_38], %47 {strides = array<i32>} : memref<2x8x128xf32, #tpu.memory_space<vmem>>, vector<1x8x128xf32>,
    %c1 = arith.constant 1 : index
    %c0_39 = arith.constant 0 : index
    %c0_40 = arith.constant 0 : index
    %48 = vector.load %arg2[%c1, %c0_39, %c0_40] : memref<2x4x128xbf16, #tpu.memory_space<vmem>>, vector<1x4x128xbf16>
    %49 = vector.shape_cast %48 : vector<1x4x128xbf16> to vector<4x128xbf16>
    %50 = arith.extf %49 : vector<4x128xbf16> to vector<4x128xf32>
    %c1_41 = arith.constant 1 : index
    %c0_42 = arith.constant 0 : index
    %c128_43 = arith.constant 128 : index
    %51 = vector.load %arg8[%c1_41, %c0_42, %c128_43] : memref<2x8x256xf32, #tpu.memory_space<vmem>>, vector<1x4x128xf32>
    %52 = vector.shape_cast %51 : vector<1x4x128xf32> to vector<4x128xf32>
    %53 = vector.shape_cast %50 : vector<4x128xf32> to vector<1x4x128xf32>
    tpu.vector_store %arg8[%c1_41, %c0_42, %c128_43], %53 {strides = array<i32>} : memref<2x8x256xf32, #tpu.memory_space<vmem>>, vector<1x4x128xf32>,
    %c1_44 = arith.constant 1 : index
    %c0_45 = arith.constant 0 : index
    %c124_46 = arith.constant 124 : index
    %54 = vector.load %arg8[%c1_44, %c0_45, %c124_46] : memref<2x8x256xf32, #tpu.memory_space<vmem>>, vector<1x8x128xf32>
    %55 = vector.shape_cast %54 : vector<1x8x128xf32> to vector<8x128xf32>
    %c1_47 = arith.constant 1 : index
    %c0_48 = arith.constant 0 : index
    %c126_49 = arith.constant 126 : index
    %56 = vector.load %arg8[%c1_47, %c0_48, %c126_49] : memref<2x8x256xf32, #tpu.memory_space<vmem>>, vector<1x8x128xf32>
    %57 = vector.shape_cast %56 : vector<1x8x128xf32> to vector<8x128xf32>
    %c1_50 = arith.constant 1 : index
    %c0_51 = arith.constant 0 : index
    %c128_52 = arith.constant 128 : index
    %58 = vector.load %arg8[%c1_50, %c0_51, %c128_52] : memref<2x8x256xf32, #tpu.memory_space<vmem>>, vector<1x8x128xf32>
    %59 = vector.shape_cast %58 : vector<1x8x128xf32> to vector<8x128xf32>
    %60 = tpu.concatenate %55, %57, %59 in 0 : vector<8x128xf32>, vector<8x128xf32>, vector<8x128xf32> -> vector<24x128xf32>
    %cst_53 = arith.constant dense<0.000000e+00> : vector<16x128xf32>
    %61 = tpu.matmul %3, %60, %cst_53 {dimension_numbers = #tpu.dot_dimension_numbers<[1], [0], [0], [1], [0, 0, 1, 1], [], []>} : vector<16x24xf32>, vector<24x128xf32>, vector<16x128xf32> -> vector<16x128xf32>
    %62 = vector.broadcast %4 : vector<16x1xf32> to vector<16x128xf32>
    %63 = arith.addf %61, %62 : vector<16x128xf32>
    %64 = vector.extract_strided_slice %63 {offsets = [0, 0], sizes = [8, 128], strides = [1, 1]} : vector<16x128xf32> to vector<8x128xf32>
    %cst_54 = arith.constant 0.000000e+00 : f32
    %65 = vector.broadcast %cst_54 : f32 to vector<8x128xf32>
    %66 = arith.maximumf %64, %65 : vector<8x128xf32>
    %67 = vector.extract_strided_slice %63 {offsets = [8, 0], sizes = [8, 128], strides = [1, 1]} : vector<16x128xf32> to vector<8x128xf32>
    %c1_55 = arith.constant 1 : index
    %c0_56 = arith.constant 0 : index
    %c128_57 = arith.constant 128 : index
    %68 = vector.load %arg9[%c1_55, %c0_56, %c128_57] : memref<2x8x256xf32, #tpu.memory_space<vmem>>, vector<1x8x128xf32>
    %69 = vector.shape_cast %68 : vector<1x8x128xf32> to vector<8x128xf32>
    %70 = vector.shape_cast %66 : vector<8x128xf32> to vector<1x8x128xf32>
    tpu.vector_store %arg9[%c1_55, %c0_56, %c128_57], %70 {strides = array<i32>} : memref<2x8x256xf32, #tpu.memory_space<vmem>>, vector<1x8x128xf32>,
    %c1_58 = arith.constant 1 : index
    %c0_59 = arith.constant 0 : index
    %c124_60 = arith.constant 124 : index
    %71 = vector.load %arg9[%c1_58, %c0_59, %c124_60] : memref<2x8x256xf32, #tpu.memory_space<vmem>>, vector<1x8x128xf32>
    %72 = vector.shape_cast %71 : vector<1x8x128xf32> to vector<8x128xf32>
    %c1_61 = arith.constant 1 : index
    %c0_62 = arith.constant 0 : index
    %c126_63 = arith.constant 126 : index
    %73 = vector.load %arg9[%c1_61, %c0_62, %c126_63] : memref<2x8x256xf32, #tpu.memory_space<vmem>>, vector<1x8x128xf32>
    %74 = vector.shape_cast %73 : vector<1x8x128xf32> to vector<8x128xf32>
    %c1_64 = arith.constant 1 : index
    %c0_65 = arith.constant 0 : index
    %c128_66 = arith.constant 128 : index
    %75 = vector.load %arg9[%c1_64, %c0_65, %c128_66] : memref<2x8x256xf32, #tpu.memory_space<vmem>>, vector<1x8x128xf32>
    %76 = vector.shape_cast %75 : vector<1x8x128xf32> to vector<8x128xf32>
    %77 = tpu.concatenate %72, %74, %76 in 0 : vector<8x128xf32>, vector<8x128xf32>, vector<8x128xf32> -> vector<24x128xf32>
    %cst_67 = arith.constant dense<0.000000e+00> : vector<8x128xf32>
    %78 = tpu.matmul %5, %77, %cst_67 {dimension_numbers = #tpu.dot_dimension_numbers<[1], [0], [0], [1], [0, 0, 1, 1], [], []>} : vector<8x24xf32>, vector<24x128xf32>, vector<8x128xf32> -> vector<8x128xf32>
    %79 = vector.broadcast %6 : vector<8x1xf32> to vector<8x128xf32>
    %80 = arith.addf %78, %79 : vector<8x128xf32>
    %cst_68 = arith.constant 0.000000e+00 : f32
    %81 = vector.broadcast %cst_68 : f32 to vector<8x128xf32>
    %82 = arith.maximumf %80, %81 : vector<8x128xf32>
    %83 = arith.addf %82, %67 : vector<8x128xf32>
    %cst_69 = arith.constant 0.000000e+00 : f32
    %84 = vector.broadcast %cst_69 : f32 to vector<8x128xf32>
    %85 = arith.maximumf %83, %84 : vector<8x128xf32>
    %c1_70 = arith.constant 1 : index
    %c0_71 = arith.constant 0 : index
    %c0_72 = arith.constant 0 : index
    %86 = vector.load %arg7[%c1_70, %c0_71, %c0_72] : memref<2x8x128xf32, #tpu.memory_space<vmem>>, vector<1x8x128xf32>
    %87 = vector.shape_cast %86 : vector<1x8x128xf32> to vector<8x128xf32>
    %88 = vector.shape_cast %85 : vector<8x128xf32> to vector<1x8x128xf32>
    tpu.vector_store %arg7[%c1_70, %c0_71, %c0_72], %88 {strides = array<i32>} : memref<2x8x128xf32, #tpu.memory_space<vmem>>, vector<1x8x128xf32>,
    return
  }
  func.func @transform_0(%arg0: i32, %arg1: i32) -> (i32, i32, i32) {
    %c0_i32 = arith.constant 0 : i32
    %c0_i32_0 = arith.constant 0 : i32
    return %arg0, %c0_i32, %arg1 : i32, i32, i32
  }
  func.func @transform_1(%arg0: i32, %arg1: i32) -> (i32, i32) {
    %c0_i32 = arith.constant 0 : i32
    %c0_i32_0 = arith.constant 0 : i32
    %c0_i32_1 = arith.constant 0 : i32
    return %c0_i32, %c0_i32_0 : i32, i32
  }
  func.func @transform_2(%arg0: i32, %arg1: i32) -> (i32, i32) {
    %c0_i32 = arith.constant 0 : i32
    %c0_i32_0 = arith.constant 0 : i32
    %c0_i32_1 = arith.constant 0 : i32
    return %c0_i32, %c0_i32_0 : i32, i32
  }
  func.func @transform_3(%arg0: i32, %arg1: i32) -> (i32, i32) {
    %c0_i32 = arith.constant 0 : i32
    %c0_i32_0 = arith.constant 0 : i32
    %c0_i32_1 = arith.constant 0 : i32
    return %c0_i32, %c0_i32_0 : i32, i32
  }
  func.func @transform_4(%arg0: i32, %arg1: i32) -> (i32, i32) {
    %c0_i32 = arith.constant 0 : i32
    %c0_i32_0 = arith.constant 0 : i32
    %c0_i32_1 = arith.constant 0 : i32
    return %c0_i32, %c0_i32_0 : i32, i32
  }
  func.func @transform_5(%arg0: i32, %arg1: i32) -> (i32, i32, i32) {
    %c0_i32 = arith.constant 0 : i32
    %c0_i32_0 = arith.constant 0 : i32
    return %arg0, %c0_i32, %arg1 : i32, i32, i32
  }
}

</mosaic_0001>

<llo_original>
// kernel: tpu_custom_call.1
$region0: #{tpu_custom_call.1}
  #allocation0 [shape = 'u32[]', space=smem, size = 0x4, offset = 0x4, fixed_abs, tag = 'smem constant byte address 0x4 - core index']
  #allocation1 [shape = 'u32[72,128]{1,0:T(1,128)}', space=vmem, size = 0x9000, scoped, tag = 'internal scratch']
  #allocation2 [shape = 'f32[2,8,256]{2,1,0:T(8,128)}', space=vmem, size = 0x4000, scoped, tag = 'scratch operand']
  #allocation3 [shape = 'f32[2,8,256]{2,1,0:T(8,128)}', space=vmem, size = 0x4000, scoped, tag = 'scratch operand']
  %s0 = inlined_call_operand.hbm [shape: bf16[2,4,128], index: 0, kind: input, shape index: {}]
  %s1 = inlined_call_operand.vmem [shape: f32[16,24], index: 1, kind: input, shape index: {}]
  %s2 = inlined_call_operand.vmem [shape: f32[16,1], index: 2, kind: input, shape index: {}]
  %s3 = inlined_call_operand.vmem [shape: f32[8,24], index: 3, kind: input, shape index: {}]
  %s4 = inlined_call_operand.vmem [shape: f32[8,1], index: 4, kind: input, shape index: {}]
  %s5 = inlined_call_operand.hbm [shape: f32[2,8,128], index: 5, kind: output, shape index: {}]
  %s6 = sld [smem:[#allocation0]]
  $region38: #{tpu_custom_call.1} parent=0
    _
  %s8 = ssub.s32 1, %s6
  %s9 = scalar_select 0, %s8, %s6
  $region1: #{tpu_custom_call.1} parent=0
    #allocation4 [shape = 'u8[2048]{0}', space=vmem, size = 0x800, scoped, tag = 'input window, operand 0, single buffered']
    #allocation5 [shape = 's32[1]{0}', space=sflag, size = 0x4, scoped, tag = 'scoped memory for tpu_custom_call.1']
    #allocation6 [shape = 's32[1]{0}', space=sflag, size = 0x4, scoped, tag = 'scoped memory for tpu_custom_call.1']
    #allocation7 [shape = 'u8[8192]{0}', space=vmem, size = 0x2000, scoped, tag = 'output window, operand 0, single buffered']
    %10 = vsyncpa [#allocation5], 0
    %11 = vsyncpa [#allocation6], 0
    // Predicated region
    $region2: #{tpu_custom_call.1} parent=1 // pred_check
      _
    $region3: #{tpu_custom_call.1} parent=1 // pred_check_branch
      %13 = sbr.rel (0) target = $region5
    $region4: #{tpu_custom_call.1} parent=1 // pred_region
      %15 = vsyncadd [#allocation5], 0
      %s16 = sshll.u32 %s0, 4
      %s17 = int_to_ptr.hbm [resolvable:$true] %s16
      %s18 = sshll.u32 [#allocation4], 4
      %s19 = int_to_ptr.vmem [resolvable:$true] %s18
      %24 = dma.hbm_to_vmem [thread:$0]  %s17, 64, %s19, [#allocation5], 32, 32, 2
    $region5: #{tpu_custom_call.1} parent=1 // pred_fallthru
      _
    // Predicated region
    $region6: #{tpu_custom_call.1} parent=1 // pred_check
      _
    $region7: #{tpu_custom_call.1} parent=1 // pred_check_branch
      %26 = sbr.rel (0) target = $region9
    $region8: #{tpu_custom_call.1} parent=1 // pred_region
      _
    $region9: #{tpu_custom_call.1} parent=1 // pred_fallthru
      _
    // Predicated region
    $region10: #{tpu_custom_call.1} parent=1 // pred_check
      _
    $region11: #{tpu_custom_call.1} parent=1 // pred_check_branch
      %28 = sbr.rel (0) target = $region13
    $region12: #{tpu_custom_call.1} parent=1 // pred_region
      _
    $region13: #{tpu_custom_call.1} parent=1 // pred_fallthru
      _
    // Predicated region
    $region14: #{tpu_custom_call.1} parent=1 // pred_check
      _
    $region15: #{tpu_custom_call.1} parent=1 // pred_check_branch
      %30 = sbr.rel (0) target = $region17
    $region16: #{tpu_custom_call.1} parent=1 // pred_region
      _
    $region17: #{tpu_custom_call.1} parent=1 // pred_fallthru
      _
    // Predicated region
    $region18: #{tpu_custom_call.1} parent=1 // pred_check
      _
    $region19: #{tpu_custom_call.1} parent=1 // pred_check_branch
      %32 = sbr.rel (0) target = $region21
    $region20: #{tpu_custom_call.1} parent=1 // pred_region
      _
    $region21: #{tpu_custom_call.1} parent=1 // pred_fallthru
      _
    // Predicated region
    $region22: #{tpu_custom_call.1} parent=1 // pred_check
      _
    $region23: #{tpu_custom_call.1} parent=1 // pred_check_branch
      %34 = sbr.rel (0) target = $region25
    $region24: #{tpu_custom_call.1} parent=1 // pred_region
      %36 = dma.done [#allocation5], 64
    $region25: #{tpu_custom_call.1} parent=1 // pred_fallthru
      _
    %p37 = scmp.eq.s32.totalorder 0, 0
    // Predicated region
    $region26: #{tpu_custom_call.1} parent=1 // pred_check
      %p38 = pneg %p37
    $region27: #{tpu_custom_call.1} parent=1 // pred_check_branch
      %40 = sbr.rel (%p38) target = $region29
    $region28: #{tpu_custom_call.1} parent=1 // pred_region
      %41 = vst [vmem:[#allocation2] sm:$0xff] 0.0
      %42 = vst [vmem:[#allocation2 + $0x8] sm:$0xff] 0.0
      %43 = vst [vmem:[#allocation2 + $0x10] sm:$0xff] 0.0
      %44 = vst [vmem:[#allocation2 + $0x18] sm:$0xff] 0.0
      %45 = vst [vmem:[#allocation3] sm:$0xff] 0.0
      %46 = vst [vmem:[#allocation3 + $0x8] sm:$0xff] 0.0
      %47 = vst [vmem:[#allocation3 + $0x10] sm:$0xff] 0.0
      %48 = vst [vmem:[#allocation3 + $0x18] sm:$0xff] 0.0
    $region29: #{tpu_custom_call.1} parent=1 // pred_fallthru
      _
    %v49 = vld [vmem:[%s1] sm:$0xff]
    %v50 = vld [vmem:[%s1 + $0x8] sm:$0xff]
    %v51 = vld [vmem:[%s2] sm:$0xff]
    %v52 = vld [vmem:[%s2 + $0x8] sm:$0xff]
    %v53 = vld [vmem:[%s3] sm:$0xff]
    %v54 = vld [vmem:[%s4] sm:$0xff]
    %v55 = vld [vmem:[#allocation4] sm:$0x3]
    %v56 = vunpack.c.l.bf16 %v55
    %57 = vst [vmem:[#allocation2 + $0x8] sm:$0xf] %v56
    %v58 = vld [vmem:[#allocation2] sm:$0xff]
    %v59 = vld [vmem:[#allocation2 + $0x8] sm:$0xff]
    %62 = vrot.lane.b32.xlu0 %v58, 126
    %v63 = vpop.permute.xlu0 %62
    %64 = vrot.lane.b32.xlu0 %v59, 126
    %v65 = vpop.permute.xlu0 %64
    %vm66 = vcmask 1031168
    %v67 = vsel %vm66, %v63, %v65
    %68 = vrot.lane.b32.xlu0 %v59, 124
    %v69 = vpop.permute.xlu0 %68
    %71 = vset.pattern.permute.xlu0 0
    %72 = vperm.xlu0 %71, %v51
    %v73 = vpop.permute.xlu0 %72
    %76 = vset.pattern.permute.xlu0 0
    %77 = vperm.xlu0 %76, %v52
    %v78 = vpop.permute.xlu0 %77
    %80 = vrot.lane.b32.xlu0 %v58, 4
    %v81 = vpop.permute.xlu0 %80
    %82 = vrot.lane.b32.xlu0 %v59, 4
    %v83 = vpop.permute.xlu0 %82
    %84 = vrot.lane.b32.xlu0 %v67, 4
    %v85 = vpop.permute.xlu0 %84
    %86 = vrot.lane.b32.xlu0 %v65, 4
    %v87 = vpop.permute.xlu0 %86
    %88 = vrot.lane.b32.xlu0 %v69, 4
    %v89 = vpop.permute.xlu0 %88
    %vm90 = vcmask 31744
    %v91 = vsel %vm90, %v81, %v83
    %v92 = vsel %vm90, %v85, %v87
    %vm96 = vcmask 195584
    %v98 = vsel %vm96, %v49, 0
    %v101 = vsel %vm96, %v50, 0
    %103 = vmatpush.msra.mxu0 0.0
    %104 = vmatpush.msra.mxu0 0.0
    %105 = vmatpush.msra.mxu0 0.0
    %106 = vmatpush.msra.mxu0 0.0
    %107 = vmatpush.msra.mxu0 0.0
    %108 = vmatpush.msra.mxu0 0.0
    %109 = vmatpush.msra.mxu0 0.0
    %110 = vmatpush.msra.mxu0 0.0
    %111 = vmatpush.msra.mxu0 0.0
    %112 = vmatpush.msra.mxu0 0.0
    %113 = vmatpush.msra.mxu0 0.0
    %114 = vmatpush.msra.mxu0 0.0
    %115 = vmatpush.msra.mxu0 0.0
    %116 = vmatpush.msra.mxu0 %v89
    %117 = vmatpush.msra.mxu0 %v92
    %118 = vmatpush.msra.mxu0 %v91
    %119 = vmatmul.f32.gmra.mxu0 %v98
    %v120 = vpop.f32.mrf.mxu0
    %v121 = vadd.f32 %v73, %v120
    %122 = vmatmul.f32.gmra.mxu0 %v101
    %v123 = vpop.f32.mrf.mxu0
    %v124 = vadd.f32 %v78, %v123
    %125 = vdwg.mxu0
    %v126 = vmax.f32 %v121, 0.0
    %127 = vst [vmem:[#allocation3 + $0x8] sm:$0xff] %v126
    %v128 = vld [vmem:[#allocation3] sm:$0xff]
    %v129 = vld [vmem:[#allocation3 + $0x8] sm:$0xff]
    %132 = vrot.lane.b32.xlu0 %v128, 126
    %v133 = vpop.permute.xlu0 %132
    %134 = vrot.lane.b32.xlu0 %v129, 126
    %v135 = vpop.permute.xlu0 %134
    %v136 = vsel %vm66, %v133, %v135
    %137 = vrot.lane.b32.xlu0 %v129, 124
    %v138 = vpop.permute.xlu0 %137
    %140 = vset.pattern.permute.xlu0 0
    %141 = vperm.xlu0 %140, %v54
    %v142 = vpop.permute.xlu0 %141
    %144 = vrot.lane.b32.xlu0 %v128, 4
    %v145 = vpop.permute.xlu0 %144
    %146 = vrot.lane.b32.xlu0 %v129, 4
    %v147 = vpop.permute.xlu0 %146
    %148 = vrot.lane.b32.xlu0 %v136, 4
    %v149 = vpop.permute.xlu0 %148
    %150 = vrot.lane.b32.xlu0 %v135, 4
    %v151 = vpop.permute.xlu0 %150
    %152 = vrot.lane.b32.xlu0 %v138, 4
    %v153 = vpop.permute.xlu0 %152
    %v154 = vsel %vm90, %v145, %v147
    %v155 = vsel %vm90, %v149, %v151
    %v160 = vsel %vm96, %v53, 0
    %162 = vmatpush.msra.mxu0 0.0
    %163 = vmatpush.msra.mxu0 0.0
    %164 = vmatpush.msra.mxu0 0.0
    %165 = vmatpush.msra.mxu0 0.0
    %166 = vmatpush.msra.mxu0 0.0
    %167 = vmatpush.msra.mxu0 0.0
    %168 = vmatpush.msra.mxu0 0.0
    %169 = vmatpush.msra.mxu0 0.0
    %170 = vmatpush.msra.mxu0 0.0
    %171 = vmatpush.msra.mxu0 0.0
    %172 = vmatpush.msra.mxu0 0.0
    %173 = vmatpush.msra.mxu0 0.0
    %174 = vmatpush.msra.mxu0 0.0
    %175 = vmatpush.msra.mxu0 %v153
    %176 = vmatpush.msra.mxu0 %v155
    %177 = vmatpush.msra.mxu0 %v154
    %178 = vmatmul.f32.gmra.mxu0 %v160
    %v179 = vpop.f32.mrf.mxu0
    %v180 = vadd.f32 %v142, %v179
    %181 = vdwg.mxu0
    %v182 = vmax.f32 %v180, 0.0
    %v183 = vadd.f32 %v182, %v124
    %v184 = vmax.f32 %v183, 0.0
    %185 = vst [vmem:[#allocation7] sm:$0xff] %v184
    %s186 = scalar_lea.vmem [#allocation4], 2
    %v187 = vld [vmem:[%s186] sm:$0x3]
    %v188 = vunpack.c.l.bf16 %v187
    %s189 = scalar_lea.vmem [#allocation2], 16
    %190 = vst [vmem:[%s189 + $0x8] sm:$0xf] %v188
    %v191 = vld [vmem:[%s189] sm:$0xff]
    %v192 = vld [vmem:[%s189 + $0x8] sm:$0xff]
    %195 = vrot.lane.b32.xlu0 %v191, 126
    %v196 = vpop.permute.xlu0 %195
    %197 = vrot.lane.b32.xlu0 %v192, 126
    %v198 = vpop.permute.xlu0 %197
    %v199 = vsel %vm66, %v196, %v198
    %200 = vrot.lane.b32.xlu0 %v192, 124
    %v201 = vpop.permute.xlu0 %200
    %202 = vrot.lane.b32.xlu0 %v191, 4
    %v203 = vpop.permute.xlu0 %202
    %204 = vrot.lane.b32.xlu0 %v192, 4
    %v205 = vpop.permute.xlu0 %204
    %206 = vrot.lane.b32.xlu0 %v199, 4
    %v207 = vpop.permute.xlu0 %206
    %208 = vrot.lane.b32.xlu0 %v198, 4
    %v209 = vpop.permute.xlu0 %208
    %210 = vrot.lane.b32.xlu0 %v201, 4
    %v211 = vpop.permute.xlu0 %210
    %v212 = vsel %vm90, %v203, %v205
    %v213 = vsel %vm90, %v207, %v209
    %217 = vmatpush.msra.mxu0 0.0
    %218 = vmatpush.msra.mxu0 0.0
    %219 = vmatpush.msra.mxu0 0.0
    %220 = vmatpush.msra.mxu0 0.0
    %221 = vmatpush.msra.mxu0 0.0
    %222 = vmatpush.msra.mxu0 0.0
    %223 = vmatpush.msra.mxu0 0.0
    %224 = vmatpush.msra.mxu0 0.0
    %225 = vmatpush.msra.mxu0 0.0
    %226 = vmatpush.msra.mxu0 0.0
    %227 = vmatpush.msra.mxu0 0.0
    %228 = vmatpush.msra.mxu0 0.0
    %229 = vmatpush.msra.mxu0 0.0
    %230 = vmatpush.msra.mxu0 %v211
    %231 = vmatpush.msra.mxu0 %v213
    %232 = vmatpush.msra.mxu0 %v212
    %233 = vmatmul.f32.gmra.mxu0 %v98
    %v234 = vpop.f32.mrf.mxu0
    %v235 = vadd.f32 %v73, %v234
    %236 = vmatmul.f32.gmra.mxu0 %v101
    %v237 = vpop.f32.mrf.mxu0
    %v238 = vadd.f32 %v78, %v237
    %239 = vdwg.mxu0
    %v240 = vmax.f32 %v235, 0.0
    %s241 = scalar_lea.vmem [#allocation3], 16
    %242 = vst [vmem:[%s241 + $0x8] sm:$0xff] %v240
    %v243 = vld [vmem:[%s241] sm:$0xff]
    %v244 = vld [vmem:[%s241 + $0x8] sm:$0xff]
    %247 = vrot.lane.b32.xlu0 %v243, 126
    %v248 = vpop.permute.xlu0 %247
    %249 = vrot.lane.b32.xlu0 %v244, 126
    %v250 = vpop.permute.xlu0 %249
    %v251 = vsel %vm66, %v248, %v250
    %252 = vrot.lane.b32.xlu0 %v244, 124
    %v253 = vpop.permute.xlu0 %252
    %254 = vrot.lane.b32.xlu0 %v243, 4
    %v255 = vpop.permute.xlu0 %254
    %256 = vrot.lane.b32.xlu0 %v244, 4
    %v257 = vpop.permute.xlu0 %256
    %258 = vrot.lane.b32.xlu0 %v251, 4
    %v259 = vpop.permute.xlu0 %258
    %260 = vrot.lane.b32.xlu0 %v250, 4
    %v261 = vpop.permute.xlu0 %260
    %262 = vrot.lane.b32.xlu0 %v253, 4
    %v263 = vpop.permute.xlu0 %262
    %v264 = vsel %vm90, %v255, %v257
    %v265 = vsel %vm90, %v259, %v261
    %269 = vmatpush.msra.mxu0 0.0
    %270 = vmatpush.msra.mxu0 0.0
    %271 = vmatpush.msra.mxu0 0.0
    %272 = vmatpush.msra.mxu0 0.0
    %273 = vmatpush.msra.mxu0 0.0
    %274 = vmatpush.msra.mxu0 0.0
    %275 = vmatpush.msra.mxu0 0.0
    %276 = vmatpush.msra.mxu0 0.0
    %277 = vmatpush.msra.mxu0 0.0
    %278 = vmatpush.msra.mxu0 0.0
    %279 = vmatpush.msra.mxu0 0.0
    %280 = vmatpush.msra.mxu0 0.0
    %281 = vmatpush.msra.mxu0 0.0
    %282 = vmatpush.msra.mxu0 %v263
    %283 = vmatpush.msra.mxu0 %v265
    %284 = vmatpush.msra.mxu0 %v264
    %285 = vmatmul.f32.gmra.mxu0 %v160
    %v286 = vpop.f32.mrf.mxu0
    %v287 = vadd.f32 %v142, %v286
    %288 = vdwg.mxu0
    %v289 = vmax.f32 %v287, 0.0
    %v290 = vadd.f32 %v289, %v238
    %v291 = vmax.f32 %v290, 0.0
    %s292 = scalar_lea.vmem [#allocation7], 8
    %293 = vst [vmem:[%s292] sm:$0xff] %v291
    // Predicated region
    $region30: #{tpu_custom_call.1} parent=1 // pred_check
      _
    $region31: #{tpu_custom_call.1} parent=1 // pred_check_branch
      %295 = sbr.rel (0) target = $region33
    $region32: #{tpu_custom_call.1} parent=1 // pred_region
      %297 = vsyncadd [#allocation6], 0
      %s298 = sshll.u32 [#allocation7], 4
      %s299 = int_to_ptr.vmem [resolvable:$true] %s298
      %s300 = sshll.u32 %s5, 4
      %s301 = int_to_ptr.hbm [resolvable:$true] %s300
      %306 = dma.vmem_to_hbm [thread:$0]  %s299, 256, %s301, [#allocation6], 128, 128, 8
    $region33: #{tpu_custom_call.1} parent=1 // pred_fallthru
      _
    // Predicated region
    $region34: #{tpu_custom_call.1} parent=1 // pred_check
      _
    $region35: #{tpu_custom_call.1} parent=1 // pred_check_branch
      %308 = sbr.rel (0) target = $region37
    $region36: #{tpu_custom_call.1} parent=1 // pred_region
      %310 = dma.done [#allocation6], 256
    $region37: #{tpu_custom_call.1} parent=1 // pred_fallthru
      _
    %311 = vsyncpa [#allocation5], 1
    %312 = vsyncpa [#allocation6], 1

</llo_original>
